<compile_context>
chip_gen: v7x
topology: tpu7x:2x2x1
jax: 0.10.0
libtpu: 0.0.40
codegen_flags: <defaults>
</compile_context>

<pallas_src>
import jax
import jax.numpy as jnp
from jax.experimental import pallas as pl
from jax.experimental.pallas import tpu as pltpu

_LANE = 128


def _istereo_linear_kernel(scaler_ref, x_ref, wm_ref, wl_ref, b_ref, o_ref):
    # scaler_ref: SMEM (1,)        -- inp_scaler
    # x_ref:      VMEM (TB, D)     -- batch tile of inputs (native dtype)
    # wm_ref:     VMEM (D, Opad)   -- pre-normalized weight rows 0..D-1, transposed, bf16
    # wl_ref:     VMEM (1, Opad)   -- pre-normalized weight row D (stereographic coord), f32
    # b_ref:      VMEM (1, Opad)   -- bias, f32
    # o_ref:      VMEM (TB, Opad)
    s = scaler_ref[0]
    x = x_ref[...].astype(jnp.float32)                            # (TB, D)

    # sqnorm of (x * inp_scaler): fold the scalar into the row reduction.
    sqnorm = (s * s) * jnp.sum(x * x, axis=1, keepdims=True)      # (TB, 1)
    # EUP reciprocal (separate VLIW slot) instead of an exact VALU divide.
    inv = pl.reciprocal(sqnorm + 1.0, approx=True)                # (TB, 1)
    x_scaled = x * ((2.0 * s) * inv)                              # == (x*s) * 2/(sqnorm+1)
    new_dim = (sqnorm - 1.0) * inv                                # (TB, 1)

    # MXU hot path: bf16 operands, f32 accumulation.
    out = jnp.dot(x_scaled.astype(jnp.bfloat16), wm_ref[...],
                  preferred_element_type=jnp.float32)             # (TB, Opad)
    # Rank-1 contribution of the appended coordinate + bias stay in f32 on the VPU.
    out = out + new_dim * wl_ref[...]
    out = out + b_ref[...]
    o_ref[...] = out.astype(o_ref.dtype)


def prepare_istereo_weights(weight, bias):
    """One-time weight preprocessing. Hoist this out of the hot path for static weights.

    weight: (O, D+1), bias: (O,)  ->  wm (D, Opad) bf16, wl (1, Opad) f32, b2 (1, Opad) f32
    """
    O, Dp1 = weight.shape
    D = Dp1 - 1

    # normalize=True: each weight row gets unit L2 norm (rsqrt + multiply, no divide).
    w = weight.astype(jnp.float32)
    w = w * jax.lax.rsqrt(jnp.sum(w * w, axis=1, keepdims=True))  # (O, D+1)
    wt = w.T                                                      # (D+1, O)

    # Pad the output dim to the 128-lane width: unmasked vst + full MXU columns.
    o_pad = pl.cdiv(O, _LANE) * _LANE
    pad_o = o_pad - O
    wm = jnp.pad(wt[:D, :], ((0, 0), (0, pad_o))).astype(jnp.bfloat16)        # (D, Opad)
    wl = jnp.pad(wt[D:D + 1, :], ((0, 0), (0, pad_o))).astype(jnp.float32)    # (1, Opad)
    b2 = jnp.pad(bias.reshape(1, O).astype(jnp.float32), ((0, 0), (0, pad_o)))
    return wm, wl, b2


def istereo_linear_apply(x, wm, wl, b2, inp_scaler, *, out_dim=None,
                         block_b=512, return_padded=False):
    """Hot-path entry: x (B, D) any float dtype, wm/wl/b2 from prepare_istereo_weights."""
    B, D = x.shape
    Dw, o_pad = wm.shape
    assert Dw == D

    # Sublane alignment of the batch tile (f32 -> 8 rows, bf16/f16 -> 16).
    sub = 16 if x.dtype in (jnp.bfloat16, jnp.float16) else 8
    if B > 2 * block_b:
        tb = block_b
    else:
        # Aim for >= 2 grid steps so v7x's second TensorCore isn't idle.
        tb = ((pl.cdiv(B, 2) + sub - 1) // sub) * sub
        if tb >= B:
            tb = B            # too small to split usefully; single full-batch tile
    grid = (pl.cdiv(B, tb),)  # partial tail tile is safe: rows independent, OOB writes dropped

    scaler = jnp.asarray(inp_scaler).reshape(1).astype(jnp.float32)

    # Constant-index operands are single-buffered (no benefit from double-buffering).
    const_buf = pl.Buffered(1)

    out = pl.pallas_call(
        _istereo_linear_kernel,
        out_shape=jax.ShapeDtypeStruct((B, o_pad), jnp.float32),
        grid=grid,
        in_specs=[
            pl.BlockSpec(memory_space=pltpu.SMEM),                # inp_scaler (scalar)
            pl.BlockSpec((tb, D), lambda i: (i, 0)),              # x batch tile (pipelined)
            pl.BlockSpec((D, o_pad), lambda i: (0, 0),
                         pipeline_mode=const_buf),                # W_main (bf16, resident)
            pl.BlockSpec((1, o_pad), lambda i: (0, 0),
                         pipeline_mode=const_buf),                # w_last (stereo coord)
            pl.BlockSpec((1, o_pad), lambda i: (0, 0),
                         pipeline_mode=const_buf),                # bias
        ],
        out_specs=pl.BlockSpec((tb, o_pad), lambda i: (i, 0)),
        compiler_params=pltpu.CompilerParams(
            dimension_semantics=("parallel",),                    # batch axis shards across TCs (v7x)
            vmem_limit_bytes=48 * 1024 * 1024,                    # > 32 MiB scoped default, < 64 MiB v7x
        ),
    )(scaler, x, wm, wl, b2)

    if return_padded or out_dim is None or out_dim == o_pad:
        return out
    return out[:, :out_dim]


def istereographic_linear_transform(x, weight, bias, inp_scaler, *, block_b=512):
    """Convenience one-shot wrapper (preprocess weights + apply).
    For inference with static weights, call prepare_istereo_weights once and reuse."""
    O = weight.shape[0]
    wm, wl, b2 = prepare_istereo_weights(weight, bias)
    return istereo_linear_apply(x, wm, wl, b2, inp_scaler, out_dim=O, block_b=block_b)


def _reference(x, weight, bias, inp_scaler):
    w = weight / jnp.linalg.norm(weight, axis=1, keepdims=True)
    xs = x * inp_scaler
    sq = jnp.sum(xs * xs, axis=1, keepdims=True)
    xe = jnp.concatenate([xs * 2.0 / (sq + 1.0), (sq - 1.0) / (sq + 1.0)], axis=1)
    return xe @ w.T + bias


if __name__ == "__main__":
    B, D, O = 8, 32, 16          # batch, input_dim, output_dim

    key = jax.random.PRNGKey(0)
    kx, kw, kb = jax.random.split(key, 3)

    x = jax.random.normal(kx, (B, D), dtype=jnp.float32)

    # nn.Linear(input_dim + 1, output_dim): weight (O, D+1), bias (O,)
    weight = jax.random.normal(kw, (O, D + 1), dtype=jnp.float32) / jnp.sqrt(D + 1.0)
    # __init__ row-normalization (redundant with in-forward normalization, kept for parity)
    weight = weight / jnp.linalg.norm(weight, axis=1, keepdims=True)
    bias = jax.random.normal(kb, (O,), dtype=jnp.float32) * 0.01

    # inp_scaler = 1 / sqrt(input_dim)
    inp_scaler = jnp.array([1.0 / (float(D) ** 0.5)], dtype=jnp.float32)

    out = istereographic_linear_transform(x, weight, bias, inp_scaler)
    out = jax.block_until_ready(out)

    ref = _reference(x, weight, bias, inp_scaler)
    assert out.shape == (B, O)
    # bf16 MXU operands (+ approx reciprocal) with f32 accumulation -> relaxed tolerance.
    assert jnp.allclose(out, ref, atol=2e-2, rtol=2e-2), \
        f"max abs err {jnp.max(jnp.abs(out - ref))}"

    print("KERNEL_OK")
</pallas_src>

<mosaic_0001>
module attributes {stable_mosaic.version = 11 : i64} {
  func.func @_istereo_linear_kernel(%arg0: i32, %arg1: memref<1xf32, #tpu.memory_space<smem>>, %arg2: memref<8x32xf32, #tpu.memory_space<vmem>>, %arg3: memref<32x128xbf16, #tpu.memory_space<vmem>>, %arg4: memref<1x128xf32, #tpu.memory_space<vmem>>, %arg5: memref<1x128xf32, #tpu.memory_space<vmem>>, %arg6: memref<8x128xf32, #tpu.memory_space<vmem>>) attributes {dimension_semantics = [#tpu.dimension_semantics<parallel>], iteration_bounds = array<i64: 1>, scalar_prefetch = 0 : i64, scratch_operands = 0 : i64, tpu.core_type = #tpu.core_type<tc>, window_params = [{transform_indices = @transform_0, window_bounds = array<i64: 1>}, {transform_indices = @transform_1, window_bounds = array<i64: 8, 32>}, {pipeline_mode = #tpu.pipeline_mode<synchronous>, transform_indices = @transform_2, window_bounds = array<i64: 32, 128>}, {pipeline_mode = #tpu.pipeline_mode<synchronous>, transform_indices = @transform_3, window_bounds = array<i64: 1, 128>}, {pipeline_mode = #tpu.pipeline_mode<synchronous>, transform_indices = @transform_4, window_bounds = array<i64: 1, 128>}, {transform_indices = @transform_5, window_bounds = array<i64: 8, 128>}]} {
    %c0 = arith.constant 0 : index
    %0 = memref.load %arg1[%c0] : memref<1xf32, #tpu.memory_space<smem>>
    %c0_0 = arith.constant 0 : index
    %c0_1 = arith.constant 0 : index
    %1 = vector.load %arg2[%c0_0, %c0_1] : memref<8x32xf32, #tpu.memory_space<vmem>>, vector<8x32xf32>
    %2 = arith.mulf %0, %0 : f32
    %3 = arith.mulf %1, %1 : vector<8x32xf32>
    %cst = arith.constant dense<0.000000e+00> : vector<8xf32>
    %4 = vector.multi_reduction <add>, %3, %cst [1] : vector<8x32xf32> to vector<8xf32>
    %5 = vector.shape_cast %4 : vector<8xf32> to vector<8x1xf32>
    %6 = vector.broadcast %2 : f32 to vector<8x1xf32>
    %7 = arith.mulf %6, %5 : vector<8x1xf32>
    %cst_2 = arith.constant 1.000000e+00 : f32
    %8 = vector.broadcast %cst_2 : f32 to vector<8x1xf32>
    %9 = arith.addf %7, %8 : vector<8x1xf32>
    %10 = tpu.reciprocal %9 {approx = true} : vector<8x1xf32> -> vector<8x1xf32>
    %cst_3 = arith.constant 2.000000e+00 : f32
    %11 = arith.mulf %cst_3, %0 : f32
    %12 = vector.broadcast %11 : f32 to vector<8x1xf32>
    %13 = arith.mulf %12, %10 : vector<8x1xf32>
    %14 = vector.broadcast %13 : vector<8x1xf32> to vector<8x32xf32>
    %15 = arith.mulf %1, %14 : vector<8x32xf32>
    %cst_4 = arith.constant 1.000000e+00 : f32
    %16 = vector.broadcast %cst_4 : f32 to vector<8x1xf32>
    %17 = arith.subf %7, %16 : vector<8x1xf32>
    %18 = arith.mulf %17, %10 : vector<8x1xf32>
    %19 = arith.truncf %15 : vector<8x32xf32> to vector<8x32xbf16>
    %c0_5 = arith.constant 0 : index
    %c0_6 = arith.constant 0 : index
    %20 = vector.load %arg3[%c0_5, %c0_6] : memref<32x128xbf16, #tpu.memory_space<vmem>>, vector<32x128xbf16>
    %cst_7 = arith.constant dense<0.000000e+00> : vector<8x128xf32>
    %21 = tpu.matmul %19, %20, %cst_7 {dimension_numbers = #tpu.dot_dimension_numbers<[1], [0], [0], [1], [0, 0, 1, 1], [], []>} : vector<8x32xbf16>, vector<32x128xbf16>, vector<8x128xf32> -> vector<8x128xf32>
    %c0_8 = arith.constant 0 : index
    %c0_9 = arith.constant 0 : index
    %22 = vector.load %arg4[%c0_8, %c0_9] : memref<1x128xf32, #tpu.memory_space<vmem>>, vector<1x128xf32>
    %23 = vector.broadcast %18 : vector<8x1xf32> to vector<8x128xf32>
    %24 = vector.broadcast %22 : vector<1x128xf32> to vector<8x128xf32>
    %25 = arith.mulf %23, %24 : vector<8x128xf32>
    %26 = arith.addf %21, %25 : vector<8x128xf32>
    %c0_10 = arith.constant 0 : index
    %c0_11 = arith.constant 0 : index
    %27 = vector.load %arg5[%c0_10, %c0_11] : memref<1x128xf32, #tpu.memory_space<vmem>>, vector<1x128xf32>
    %28 = vector.broadcast %27 : vector<1x128xf32> to vector<8x128xf32>
    %29 = arith.addf %26, %28 : vector<8x128xf32>
    %c0_12 = arith.constant 0 : index
    %c0_13 = arith.constant 0 : index
    %30 = vector.load %arg6[%c0_12, %c0_13] : memref<8x128xf32, #tpu.memory_space<vmem>>, vector<8x128xf32>
    tpu.vector_store %arg6[%c0_12, %c0_13], %29 {strides = array<i32>} : memref<8x128xf32, #tpu.memory_space<vmem>>, vector<8x128xf32>,
    return
  }
  func.func @transform_0(%arg0: i32) -> i32 {
    %c0_i32 = arith.constant 0 : i32
    %c0_i32_0 = arith.constant 0 : i32
    return %c0_i32 : i32
  }
  func.func @transform_1(%arg0: i32) -> (i32, i32) {
    %c0_i32 = arith.constant 0 : i32
    %c0_i32_0 = arith.constant 0 : i32
    return %arg0, %c0_i32 : i32, i32
  }
  func.func @transform_2(%arg0: i32) -> (i32, i32) {
    %c0_i32 = arith.constant 0 : i32
    %c0_i32_0 = arith.constant 0 : i32
    %c0_i32_1 = arith.constant 0 : i32
    return %c0_i32, %c0_i32_0 : i32, i32
  }
  func.func @transform_3(%arg0: i32) -> (i32, i32) {
    %c0_i32 = arith.constant 0 : i32
    %c0_i32_0 = arith.constant 0 : i32
    %c0_i32_1 = arith.constant 0 : i32
    return %c0_i32, %c0_i32_0 : i32, i32
  }
  func.func @transform_4(%arg0: i32) -> (i32, i32) {
    %c0_i32 = arith.constant 0 : i32
    %c0_i32_0 = arith.constant 0 : i32
    %c0_i32_1 = arith.constant 0 : i32
    return %c0_i32, %c0_i32_0 : i32, i32
  }
  func.func @transform_5(%arg0: i32) -> (i32, i32) {
    %c0_i32 = arith.constant 0 : i32
    %c0_i32_0 = arith.constant 0 : i32
    return %arg0, %c0_i32 : i32, i32
  }
}

</mosaic_0001>

<llo_original>
// kernel: tpu_custom_call.1
$region0: #{tpu_custom_call.1}
  #allocation0 [shape = 'u32[]', space=smem, size = 0x4, offset = 0x4, fixed_abs, tag = 'smem constant byte address 0x4 - core index']
  #allocation1 [shape = 'u32[144,128]{1,0:T(1,128)}', space=vmem, size = 0x12000, scoped, tag = 'internal scratch']
  #allocation2 [shape = 'f32[1]{0:T(128)S(6)}', space=smem, size = 0x200, scoped, tag = 'scoped memory for tpu_custom_call.1']
  %s0 = inlined_call_operand.<no memory space> [shape: f32[1], index: 0, kind: input, shape index: {}]
  %s1 = inlined_call_operand.hbm [shape: f32[8,32], index: 1, kind: input, shape index: {}]
  %s2 = inlined_call_operand.hbm [shape: bf16[32,128], index: 2, kind: input, shape index: {}]
  %s3 = inlined_call_operand.vmem [shape: f32[1,128], index: 3, kind: input, shape index: {}]
  %s4 = inlined_call_operand.vmem [shape: f32[1,128], index: 4, kind: input, shape index: {}]
  %s5 = inlined_call_operand.hbm [shape: f32[8,128], index: 5, kind: output, shape index: {}]
  %s6 = sld [smem:[#allocation0]]
  $region38: #{tpu_custom_call.1} parent=0
    _
  %s8 = ssub.s32 1, %s6
  %s9 = scalar_select 0, %s8, %s6
  %10 = sst [smem:[#allocation2]] %s0
  $region1: #{tpu_custom_call.1} parent=0
    #allocation3 [shape = 'u8[4096]{0}', space=vmem, size = 0x1000, scoped, tag = 'input window, operand 1, single buffered']
    #allocation4 [shape = 's32[1]{0}', space=sflag, size = 0x4, scoped, tag = 'scoped memory for tpu_custom_call.1']
    #allocation5 [shape = 's32[1]{0}', space=sflag, size = 0x4, scoped, tag = 'scoped memory for tpu_custom_call.1']
    #allocation6 [shape = 'u8[8192]{0}', space=vmem, size = 0x2000, scoped, tag = 'input window, operand 2, single buffered']
    #allocation7 [shape = 's32[1]{0}', space=sflag, size = 0x4, scoped, tag = 'scoped memory for tpu_custom_call.1']
    #allocation8 [shape = 'u8[4096]{0}', space=vmem, size = 0x1000, scoped, tag = 'output window, operand 0, single buffered']
    %11 = vsyncpa [#allocation4], 0
    %12 = vsyncpa [#allocation7], 0
    %13 = vsyncpa [#allocation5], 0
    // Predicated region
    $region2: #{tpu_custom_call.1} parent=1 // pred_check
      _
    $region3: #{tpu_custom_call.1} parent=1 // pred_check_branch
      %15 = sbr.rel (0) target = $region5
    $region4: #{tpu_custom_call.1} parent=1 // pred_region
      _
    $region5: #{tpu_custom_call.1} parent=1 // pred_fallthru
      _
    // Predicated region
    $region6: #{tpu_custom_call.1} parent=1 // pred_check
      _
    $region7: #{tpu_custom_call.1} parent=1 // pred_check_branch
      %17 = sbr.rel (0) target = $region9
    $region8: #{tpu_custom_call.1} parent=1 // pred_region
      %s19 = ssub.s32 128, 128
      %20 = vsyncadd [#allocation4], %s19
      %s22 = sshll.u32 [#allocation3], 4
      %s23 = int_to_ptr.vmem [resolvable:$true] %s22
      %25 = dma.hbm_to_vmem [thread:$0]  %s1, 128, %s23, [#allocation4]
    $region9: #{tpu_custom_call.1} parent=1 // pred_fallthru
      _
    // Predicated region
    $region10: #{tpu_custom_call.1} parent=1 // pred_check
      _
    $region11: #{tpu_custom_call.1} parent=1 // pred_check_branch
      %27 = sbr.rel (0) target = $region13
    $region12: #{tpu_custom_call.1} parent=1 // pred_region
      %s29 = ssub.s32 256, 256
      %30 = vsyncadd [#allocation7], %s29
      %s31 = sshll.u32 [#allocation6], 4
      %s32 = int_to_ptr.vmem [resolvable:$true] %s31
      %37 = dma.hbm_to_vmem [thread:$0]  %s2, 256, %s32, [#allocation7], 64, 64, 4
    $region13: #{tpu_custom_call.1} parent=1 // pred_fallthru
      _
    // Predicated region
    $region14: #{tpu_custom_call.1} parent=1 // pred_check
      _
    $region15: #{tpu_custom_call.1} parent=1 // pred_check_branch
      %39 = sbr.rel (0) target = $region17
    $region16: #{tpu_custom_call.1} parent=1 // pred_region
      _
    $region17: #{tpu_custom_call.1} parent=1 // pred_fallthru
      _
    // Predicated region
    $region18: #{tpu_custom_call.1} parent=1 // pred_check
      _
    $region19: #{tpu_custom_call.1} parent=1 // pred_check_branch
      %41 = sbr.rel (0) target = $region21
    $region20: #{tpu_custom_call.1} parent=1 // pred_region
      _
    $region21: #{tpu_custom_call.1} parent=1 // pred_fallthru
      _
    // Predicated region
    $region22: #{tpu_custom_call.1} parent=1 // pred_check
      _
    $region23: #{tpu_custom_call.1} parent=1 // pred_check_branch
      %43 = sbr.rel (0) target = $region25
    $region24: #{tpu_custom_call.1} parent=1 // pred_region
      %44 = dma.done [#allocation4], 128
    $region25: #{tpu_custom_call.1} parent=1 // pred_fallthru
      _
    // Predicated region
    $region26: #{tpu_custom_call.1} parent=1 // pred_check
      _
    $region27: #{tpu_custom_call.1} parent=1 // pred_check_branch
      %46 = sbr.rel (0) target = $region29
    $region28: #{tpu_custom_call.1} parent=1 // pred_region
      %47 = dma.done [#allocation7], 256
    $region29: #{tpu_custom_call.1} parent=1 // pred_fallthru
      _
    %s49 = sld [smem:[#allocation2]]
    %v50 = vld [vmem:[#allocation3] sm:$0xff]
    %s51 = smul.f32 %s49, %s49
    %v52 = vmul.f32 %v50, %v50
    %vm53 = vcmask 261120
    %v54 = vsel %vm53, %v52, 0.0
    %55 = vadd.xlane.f32.xlu0 %v54
    %v56 = vpop.xlane.xlu0 %55
    %v57 = vstv %s51
    %v58 = vmul.f32 %v57, %v56
    %v59 = vadd.f32 %v58, 1.0
    %v60 = vrcp.pop %v59
    %s61 = smul.f32 %s49, 2.0
    %v62 = vstv %s61
    %v63 = vmul.f32 %v62, %v60
    %v64 = vmul.f32 %v50, %v63
    %v65 = vsub.f32 %v58, 1.0
    %v66 = vmul.f32 %v65, %v60
    %v67 = vpack.c.bf16 %v64, %v64
    %v68 = vld [vmem:[#allocation6] sm:$0xf]
    %v69 = vld [vmem:[#allocation6 + $0x4] sm:$0xf]
    %v70 = vld [vmem:[#allocation6 + $0x8] sm:$0xf]
    %v71 = vld [vmem:[#allocation6 + $0xc] sm:$0xf]
    %v72 = vld [vmem:[%s3] sm:$0x1]
    %v74 = vlaneseq
    %v75 = vshrl.u32 %v74, 7
    %v76 = vsub.s32 0, %v75
    %v77 = vrot.slane %v72, %v76
    %v79 = vmul.f32 %v66, %v77
    %v84 = vunpack.c.l.b16 %v68
    %v85 = vunpack.c.l.b16 %v69
    %v86 = vunpack.c.l.b16 %v70
    %v87 = vunpack.c.l.b16 %v71
    %v88 = vpack.c.b16 %v85, %v84
    %v89 = vpack.c.b16 %v87, %v86
    %v93 = vsel %vm53, %v67, 0
    %95 = vmatprep.subr.bf16.mxu0 0
    %96 = vmatpush1.bf16.msra.mxu0 %v88
    %97 = vmatprep.subr.bf16.mxu0 0
    %98 = vmatpush1.bf16.msra.mxu0 %v89
    %99 = vmatprep.subr.bf16.mxu0 0
    %100 = vmatpush1.bf16.msra.mxu0 0
    %101 = vmatprep.subr.bf16.mxu0 0
    %102 = vmatpush1.bf16.msra.mxu0 0
    %103 = vmatprep.subr.bf16.mxu0 0
    %104 = vmatpush1.bf16.msra.mxu0 0
    %105 = vmatprep.subr.bf16.mxu0 0
    %106 = vmatpush1.bf16.msra.mxu0 0
    %107 = vmatprep.subr.bf16.mxu0 0
    %108 = vmatpush1.bf16.msra.mxu0 0
    %109 = vmatprep.subr.bf16.mxu0 0
    %110 = vmatpush1.bf16.msra.mxu0 0
    %111 = vmatprep.subr.bf16.mxu0 0
    %112 = vmatpush1.bf16.msra.mxu0 0
    %113 = vmatprep.subr.bf16.mxu0 0
    %114 = vmatpush1.bf16.msra.mxu0 0
    %115 = vmatprep.subr.bf16.mxu0 0
    %116 = vmatpush1.bf16.msra.mxu0 0
    %117 = vmatprep.subr.bf16.mxu0 0
    %118 = vmatpush1.bf16.msra.mxu0 0
    %119 = vmatprep.subr.bf16.mxu0 0
    %120 = vmatpush1.bf16.msra.mxu0 0
    %121 = vmatprep.subr.bf16.mxu0 0
    %122 = vmatpush1.bf16.msra.mxu0 0
    %123 = vmatprep.subr.bf16.mxu0 0
    %124 = vmatpush1.bf16.msra.mxu0 0
    %125 = vmatprep.subr.bf16.mxu0 0
    %126 = vmatpush1.bf16.msra.mxu0 0
    %127 = vmatprep.mubr.bf16.mxu0 0
    %128 = vmatmul.mubr.bf16.gmra.mrb[0].mxu0 %v93
    %v129 = vpop.f32.mrb[0].mxu0
    %v130 = vadd.f32 %v79, %v129
    %v131 = vpop.f32.mrb[0].mxu0
    %v132 = vpop.f32.mrb[0].mxu0
    %v133 = vpop.f32.mrb[0].mxu0
    %134 = vdwg.mxu0
    %v135 = vld [vmem:[%s4] sm:$0x1]
    %v137 = vlaneseq
    %v138 = vshrl.u32 %v137, 7
    %v139 = vsub.s32 0, %v138
    %v140 = vrot.slane %v135, %v139
    %v142 = vadd.f32 %v130, %v140
    %143 = vst [vmem:[#allocation8] sm:$0xff] %v142
    // Predicated region
    $region30: #{tpu_custom_call.1} parent=1 // pred_check
      _
    $region31: #{tpu_custom_call.1} parent=1 // pred_check_branch
      %145 = sbr.rel (0) target = $region33
    $region32: #{tpu_custom_call.1} parent=1 // pred_region
      %s147 = ssub.s32 128, 128
      %148 = vsyncadd [#allocation5], %s147
      %s150 = sshll.u32 [#allocation8], 4
      %s151 = int_to_ptr.vmem [resolvable:$true] %s150
      %153 = dma.vmem_to_hbm [thread:$0]  %s151, 128, %s5, [#allocation5]
    $region33: #{tpu_custom_call.1} parent=1 // pred_fallthru
      _
    // Predicated region
    $region34: #{tpu_custom_call.1} parent=1 // pred_check
      _
    $region35: #{tpu_custom_call.1} parent=1 // pred_check_branch
      %155 = sbr.rel (0) target = $region37
    $region36: #{tpu_custom_call.1} parent=1 // pred_region
      %156 = dma.done [#allocation5], 128
    $region37: #{tpu_custom_call.1} parent=1 // pred_fallthru
      _
    %157 = vsyncpa [#allocation4], 1
    %158 = vsyncpa [#allocation7], 1
    %159 = vsyncpa [#allocation5], 1

</llo_original>
